<compile_context>
chip_gen: v6e
topology: v6e:2x2x1
jax: 0.10.0
libtpu: 0.0.40
codegen_flags: <defaults>
</compile_context>

<pallas_src>
import functools

import jax
import jax.numpy as jnp
from jax import lax
from jax.experimental import pallas as pl
from jax.experimental.pallas import tpu as pltpu


def _round_up(x, m):
    return (x + m - 1) // m * m


def _pad2d(a, rows, cols, value=0):
    r, c = a.shape
    if r == rows and c == cols:
        return a
    return jnp.pad(a, ((0, rows - r), (0, cols - c)), constant_values=value)


def _vmem_bytes(rows, cols, dtype):
    """Bytes of a 2-D array once laid out in VMEM ((8|16)-sublane, 128-lane tiles)."""
    item = jnp.dtype(dtype).itemsize
    sub = 8 * max(1, 4 // item)          # 8 rows for 32-bit, 16 for 16-bit
    return _round_up(max(rows, 1), sub) * _round_up(max(cols, 1), 128) * item


def _global_model_kernel(n_tail_layers, uw_ref, batch_ref, bcol_ref, xw_ref, ew_ref,
                         *refs):
    """Fused GlobalModel forward for one (graph-tile, node/edge-chunk) grid point.

    refs = (w1, b1, ..., w_last, b_last, out_ref, acc_ref)
    """
    out_ref = refs[-2]
    acc_ref = refs[-1]
    tail = refs[:-2]

    tile_b = out_ref.shape[0]
    chunk_n = xw_ref.shape[0]
    chunk_e = ew_ref.shape[0]
    i = pl.program_id(0)                       # graph tile
    c = pl.program_id(1)                       # node/edge chunk (reduction axis)

    @pl.when(c == 0)
    def _():
        acc_ref[...] = uw_ref[...]             # folded layer-0 u term: u @ W0_u + b0

    # scatter_add over this chunk as one-hot matmuls (MXU, mxu_dtype-native).
    # Shift the [1, chunk] batch row by -i*tile_b (cheap) instead of the full iota.
    row_ids_n = lax.broadcasted_iota(jnp.int32, (tile_b, chunk_n), 0)
    row_ids_e = lax.broadcasted_iota(jnp.int32, (tile_b, chunk_e), 0)
    onehot_n = (row_ids_n == (batch_ref[...] - i * tile_b)).astype(xw_ref.dtype)
    onehot_e = (row_ids_e == (bcol_ref[...] - i * tile_b)).astype(ew_ref.dtype)

    acc_ref[...] += (
        jnp.dot(onehot_n, xw_ref[...], preferred_element_type=jnp.float32)
        + jnp.dot(onehot_e, ew_ref[...], preferred_element_type=jnp.float32))

    @pl.when(c == pl.num_programs(1) - 1)
    def _():
        h = jnp.maximum(acc_ref[...], 0.0)     # ReLU of (folded) layer 0
        for l in range(n_tail_layers):
            w_ref = tail[2 * l]
            b_ref = tail[2 * l + 1]
            h = (jnp.dot(h.astype(w_ref.dtype), w_ref[...],
                         preferred_element_type=jnp.float32)
                 + b_ref[...].astype(jnp.float32))
            if l < n_tail_layers - 1:
                h = jnp.maximum(h, 0.0)
        # TODO(synk): nonzero dropout would need pltpu.prng_seed + stateful_bernoulli;
        # the module is used with p=0.0 -> identity.
        out_ref[...] = h.astype(out_ref.dtype)


def global_model_forward(x, edge_index, edge_attr, u, batch, weights, biases,
                         *, tile_b=128, chunk_rows=2048, mxu_dtype=jnp.bfloat16):
    """GlobalModel forward.

    x:          [N, Fx] float32 node features
    edge_index: [2, E]  int32   (row, col)
    edge_attr:  [E, Fe] float32 edge features
    u:          [B, Fu] float32 global features
    batch:      [N]     int32   graph id per node
    weights:    list of [in_i, out_i] float32 (transposed vs PyTorch [out, in])
    biases:     list of [1, out_i]    float32
    mxu_dtype:  matmul operand dtype (bf16 default: MXU-native on v5e/v6e/v7x,
                accumulation is always f32).
    """
    n_nodes, fx = x.shape
    n_edges, fe = edge_attr.shape
    n_graphs, fu = u.shape
    n_layers = len(weights)
    in_total, hidden = weights[0].shape
    assert in_total == fx + fe + fu, "first-layer weight must match concat width"
    out_size = weights[-1].shape[1]

    hid_pad = _round_up(hidden, 128)
    out_pad = _round_up(out_size, 128)

    # ---- fold layer 0 into the streamed operands (done once in XLA, f32) ----
    w0 = weights[0]
    xw = x.astype(jnp.float32) @ w0[:fx]                        # [N, hidden]
    ew = edge_attr.astype(jnp.float32) @ w0[fx:fx + fe]         # [E, hidden]
    uw = u.astype(jnp.float32) @ w0[fx + fe:] + biases[0]       # [B, hidden]

    col = edge_index[1]
    batch = batch.astype(jnp.int32)
    batch_of_col = batch[col].astype(jnp.int32)                 # graph id per edge

    tail_params = []
    for l in range(1, n_layers):
        out_p = hid_pad if l < n_layers - 1 else out_pad
        tail_params.append(_pad2d(weights[l], hid_pad, out_p).astype(mxu_dtype))
        tail_params.append(_pad2d(biases[l], 1, out_p))         # biases stay f32

    # ---- graph-dim tiling (<=128 rows so large B spreads across v7x's 2 TCs) ----
    tile_b_eff = max(8, min(tile_b, _round_up(n_graphs, 8)))
    b_pad = _round_up(n_graphs, tile_b_eff)
    n_b_tiles = b_pad // tile_b_eff

    # ---- node/edge streaming over a last "arbitrary" grid axis (bounds VMEM) ----
    # TODO(synk): with sorted PyG batches, scalar-prefetched per-graph offsets would
    # let each graph tile stream only its own rows (O(N+E) total instead of per-tile).
    chunk_rows = max(256, _round_up(chunk_rows, 256))
    num_chunks = max(1, -(-max(n_nodes, n_edges) // chunk_rows))
    if num_chunks == 1:
        chunk_n = max(16, _round_up(n_nodes, 16))    # full-array blocks: 16-row align ok
        chunk_e = max(16, _round_up(n_edges, 16))
    else:
        chunk_n = max(256, _round_up(-(-n_nodes // num_chunks), 256))
        chunk_e = max(256, _round_up(-(-n_edges // num_chunks), 256))
    n_pad = chunk_n * num_chunks
    e_pad = chunk_e * num_chunks

    xw_p = _pad2d(xw, n_pad, hid_pad).astype(mxu_dtype)
    ew_p = _pad2d(ew, e_pad, hid_pad).astype(mxu_dtype)
    uw_p = _pad2d(uw, b_pad, hid_pad)                            # f32
    batch2d = _pad2d(batch.reshape(1, n_nodes), 1, n_pad, value=-1)
    bcol2d = _pad2d(batch_of_col.reshape(1, n_edges), 1, e_pad, value=-1)

    grid = (n_b_tiles, num_chunks)
    use_buffered = num_chunks > 2 and hasattr(pl, "Buffered")

    def _chunk_spec(rows, cols, index_map):
        if use_buffered:
            return pl.BlockSpec((rows, cols), index_map, pipeline_mode=pl.Buffered(3))
        return pl.BlockSpec((rows, cols), index_map)

    resident = pl.BlockSpec(memory_space=pltpu.MemorySpace.VMEM)  # small, load-once
    in_specs = [
        pl.BlockSpec((tile_b_eff, hid_pad), lambda i, c: (i, 0)),   # uw
        _chunk_spec(1, chunk_n, lambda i, c: (0, c)),               # batch ids
        _chunk_spec(1, chunk_e, lambda i, c: (0, c)),               # batch[col]
        _chunk_spec(chunk_n, hid_pad, lambda i, c: (c, 0)),         # xw chunk
        _chunk_spec(chunk_e, hid_pad, lambda i, c: (c, 0)),         # ew chunk
    ] + [resident] * len(tail_params)
    out_specs = pl.BlockSpec((tile_b_eff, out_pad), lambda i, c: (i, 0))

    args = [uw_p, batch2d, bcol2d, xw_p, ew_p] + tail_params

    # ---- advisory cost estimate ----
    flops = 2 * b_pad * (n_pad + e_pad) * hid_pad
    for l in range(1, n_layers):
        flops += 2 * b_pad * hid_pad * (hid_pad if l < n_layers - 1 else out_pad)
    bytes_accessed = sum(int(a.size) * a.dtype.itemsize for a in args) + b_pad * out_pad * 4
    cost = pl.CostEstimate(flops=int(flops), transcendentals=0,
                           bytes_accessed=int(bytes_accessed))

    # ---- VMEM budget from the padded VMEM layout (incl. one-hot temporaries) ----
    nbuf = 3 if use_buffered else 2
    vmem_needed = (
        nbuf * (_vmem_bytes(chunk_n, hid_pad, mxu_dtype)
                + _vmem_bytes(chunk_e, hid_pad, mxu_dtype)
                + _vmem_bytes(1, chunk_n, jnp.int32)
                + _vmem_bytes(1, chunk_e, jnp.int32))
        + 2 * _vmem_bytes(tile_b_eff, hid_pad, jnp.float32)      # uw tiles
        + 2 * _vmem_bytes(tile_b_eff, out_pad, jnp.float32)      # out tiles
        + _vmem_bytes(tile_b_eff, hid_pad, jnp.float32)          # acc scratch
        + sum(_vmem_bytes(p.shape[0], p.shape[1], p.dtype) for p in tail_params)
        + _vmem_bytes(tile_b_eff, chunk_n, mxu_dtype)            # onehot_n temp
        + _vmem_bytes(tile_b_eff, chunk_e, mxu_dtype)            # onehot_e temp
        + 2 * _vmem_bytes(tile_b_eff, hid_pad, jnp.float32))     # finalize temps
    try:
        phys_vmem = int(pltpu.get_tpu_info().vmem_capacity_bytes)
    except Exception:
        phys_vmem = 128 * 1024 * 1024
    vmem_limit = int(min(max(2 * vmem_needed, 32 * 1024 * 1024),
                         max(32 * 1024 * 1024, int(0.85 * phys_vmem))))

    kernel = functools.partial(_global_model_kernel, n_layers - 1)

    out = pl.pallas_call(
        kernel,
        out_shape=jax.ShapeDtypeStruct((b_pad, out_pad), jnp.float32),
        grid_spec=pltpu.PrefetchScalarGridSpec(
            num_scalar_prefetch=0,
            grid=grid,
            in_specs=in_specs,
            out_specs=out_specs,
            scratch_shapes=[pltpu.VMEM((tile_b_eff, hid_pad), jnp.float32)],
        ),
        compiler_params=pltpu.CompilerParams(
            dimension_semantics=("parallel", "arbitrary"),
            vmem_limit_bytes=vmem_limit,
        ),
        cost_estimate=cost,
    )(*args)

    return out[:n_graphs, :out_size]


def init_mlp_params(key, input_size, hidden_size, output_size, hidden_layer_num):
    """Deterministic init mimicking nn.Linear's U(-1/sqrt(fan_in), 1/sqrt(fan_in))."""
    sizes = [input_size] + [hidden_size] * hidden_layer_num + [output_size]
    weights, biases = [], []
    for i in range(len(sizes) - 1):
        fan_in, fan_out = sizes[i], sizes[i + 1]
        key, kw, kb = jax.random.split(key, 3)
        bound = 1.0 / (fan_in ** 0.5)
        weights.append(jax.random.uniform(kw, (fan_in, fan_out), jnp.float32, -bound, bound))
        biases.append(jax.random.uniform(kb, (1, fan_out), jnp.float32, -bound, bound))
    return weights, biases


def global_model_reference(x, edge_index, edge_attr, u, batch, weights, biases):
    """Pure-JAX reference matching the PyTorch GlobalModel forward."""
    col = edge_index[1]
    num_nodes = x.shape[0]
    num_graphs = u.shape[0]
    agg_node = jax.ops.segment_sum(x, batch, num_segments=num_graphs)
    edge_to_node = jax.ops.segment_sum(edge_attr, col, num_segments=num_nodes)
    agg_edge = jax.ops.segment_sum(edge_to_node, batch, num_segments=num_graphs)
    h = jnp.concatenate([agg_node, agg_edge, u], axis=-1)
    for i, (w, b) in enumerate(zip(weights, biases)):
        h = h @ w + b
        if i < len(weights) - 1:
            h = jnp.maximum(h, 0.0)
    return h


if __name__ == "__main__":
    # GlobalModel(node_input_size=8, edge_input_size=8, global_input_size=8,
    #             hidden_size=32, global_output_size=16, activation='ReLU', dropout=0.0)
    node_in, edge_in, glob_in = 8, 8, 8
    hidden, glob_out = 32, 16
    num_graphs, num_nodes, num_edges = 2, 16, 32

    key = jax.random.PRNGKey(0)
    kx, ke, ku, kei, kp = jax.random.split(key, 5)
    x = jax.random.normal(kx, (num_nodes, node_in), jnp.float32)
    edge_attr = jax.random.normal(ke, (num_edges, edge_in), jnp.float32)
    u = jax.random.normal(ku, (num_graphs, glob_in), jnp.float32)
    edge_index = jax.random.randint(kei, (2, num_edges), 0, num_nodes, jnp.int32)
    batch = jnp.concatenate([jnp.zeros(num_nodes // 2, jnp.int32),
                             jnp.ones(num_nodes - num_nodes // 2, jnp.int32)])

    weights, biases = init_mlp_params(kp, node_in + edge_in + glob_in,
                                      hidden, glob_out, hidden_layer_num=2)

    ref = global_model_reference(x, edge_index, edge_attr, u, batch, weights, biases)

    # bf16 MXU path (default — MXU-native on all parts, f32 accumulation).
    out_bf16 = jax.block_until_ready(
        global_model_forward(x, edge_index, edge_attr, u, batch, weights, biases))
    assert out_bf16.shape == (num_graphs, glob_out)
    assert jnp.allclose(out_bf16, ref, atol=2e-1, rtol=2e-1), "bf16 kernel mismatch vs reference"

    # f32 MXU path (exact apart from summation order / padding).
    out_f32 = jax.block_until_ready(
        global_model_forward(x, edge_index, edge_attr, u, batch, weights, biases,
                             mxu_dtype=jnp.float32))
    assert out_f32.shape == (num_graphs, glob_out)
    assert jnp.allclose(out_f32, ref, atol=1e-3, rtol=1e-3), "f32 kernel mismatch vs reference"

    print("KERNEL_OK")
</pallas_src>

<mosaic_0001>
module attributes {stable_mosaic.version = 11 : i64} {
  func.func @_global_model_kernel(%arg0: i32, %arg1: i32, %arg2: memref<8x128xf32, #tpu.memory_space<vmem>>, %arg3: memref<1x16xi32, #tpu.memory_space<vmem>>, %arg4: memref<1x32xi32, #tpu.memory_space<vmem>>, %arg5: memref<16x128xbf16, #tpu.memory_space<vmem>>, %arg6: memref<32x128xbf16, #tpu.memory_space<vmem>>, %arg7: memref<128x128xbf16, #tpu.memory_space<vmem>>, %arg8: memref<1x128xf32, #tpu.memory_space<vmem>>, %arg9: memref<128x128xbf16, #tpu.memory_space<vmem>>, %arg10: memref<1x128xf32, #tpu.memory_space<vmem>>, %arg11: memref<8x128xf32, #tpu.memory_space<vmem>>, %arg12: memref<8x128xf32, #tpu.memory_space<vmem>>) attributes {dimension_semantics = [#tpu.dimension_semantics<parallel>, #tpu.dimension_semantics<arbitrary>], iteration_bounds = array<i64: 1, 1>, scalar_prefetch = 0 : i64, scratch_operands = 1 : i64, tpu.core_type = #tpu.core_type<tc>, window_params = [{transform_indices = @transform_0, window_bounds = array<i64: 8, 128>}, {transform_indices = @transform_1, window_bounds = array<i64: 1, 16>}, {transform_indices = @transform_2, window_bounds = array<i64: 1, 32>}, {transform_indices = @transform_3, window_bounds = array<i64: 16, 128>}, {transform_indices = @transform_4, window_bounds = array<i64: 32, 128>}, {pipeline_mode = #tpu.pipeline_mode<synchronous>, transform_indices = @transform_5, window_bounds = array<i64: 128, 128>}, {pipeline_mode = #tpu.pipeline_mode<synchronous>, transform_indices = @transform_6, window_bounds = array<i64: 1, 128>}, {pipeline_mode = #tpu.pipeline_mode<synchronous>, transform_indices = @transform_7, window_bounds = array<i64: 128, 128>}, {pipeline_mode = #tpu.pipeline_mode<synchronous>, transform_indices = @transform_8, window_bounds = array<i64: 1, 128>}, {transform_indices = @transform_9, window_bounds = array<i64: 8, 128>}]} {
    %c0_i32 = arith.constant 0 : i32
    %0 = arith.cmpi eq, %arg1, %c0_i32 : i32
    %1 = arith.extui %0 : i1 to i32
    %c0_i32_0 = arith.constant 0 : i32
    %2 = arith.cmpi ne, %1, %c0_i32_0 : i32
    scf.if %2 {
      %c0_16 = arith.constant 0 : index
      %c0_17 = arith.constant 0 : index
      %34 = vector.load %arg2[%c0_16, %c0_17] : memref<8x128xf32, #tpu.memory_space<vmem>>, vector<8x128xf32>
      %c0_18 = arith.constant 0 : index
      %c0_19 = arith.constant 0 : index
      %35 = vector.load %arg12[%c0_18, %c0_19] : memref<8x128xf32, #tpu.memory_space<vmem>>, vector<8x128xf32>
      tpu.vector_store %arg12[%c0_18, %c0_19], %34 {strides = array<i32>} : memref<8x128xf32, #tpu.memory_space<vmem>>, vector<8x128xf32>,
    } else {
    }
    %3 = tpu.iota {dimensions = array<i32: 0>} : vector<8x16xi32>
    %4 = tpu.iota {dimensions = array<i32: 0>} : vector<8x32xi32>
    %c0 = arith.constant 0 : index
    %c0_1 = arith.constant 0 : index
    %5 = vector.load %arg3[%c0, %c0_1] : memref<1x16xi32, #tpu.memory_space<vmem>>, vector<1x16xi32>
    %c8_i32 = arith.constant 8 : i32
    %6 = arith.muli %arg0, %c8_i32 : i32
    %7 = vector.broadcast %6 : i32 to vector<1x16xi32>
    %8 = arith.subi %5, %7 : vector<1x16xi32>
    %9 = vector.broadcast %8 : vector<1x16xi32> to vector<8x16xi32>
    %10 = arith.cmpi eq, %3, %9 : vector<8x16xi32>
    %11 = arith.extui %10 : vector<8x16xi1> to vector<8x16xi32>
    %12 = arith.sitofp %11 : vector<8x16xi32> to vector<8x16xf32>
    %13 = arith.truncf %12 : vector<8x16xf32> to vector<8x16xbf16>
    %c0_2 = arith.constant 0 : index
    %c0_3 = arith.constant 0 : index
    %14 = vector.load %arg4[%c0_2, %c0_3] : memref<1x32xi32, #tpu.memory_space<vmem>>, vector<1x32xi32>
    %c8_i32_4 = arith.constant 8 : i32
    %15 = arith.muli %arg0, %c8_i32_4 : i32
    %16 = vector.broadcast %15 : i32 to vector<1x32xi32>
    %17 = arith.subi %14, %16 : vector<1x32xi32>
    %18 = vector.broadcast %17 : vector<1x32xi32> to vector<8x32xi32>
    %19 = arith.cmpi eq, %4, %18 : vector<8x32xi32>
    %20 = arith.extui %19 : vector<8x32xi1> to vector<8x32xi32>
    %21 = arith.sitofp %20 : vector<8x32xi32> to vector<8x32xf32>
    %22 = arith.truncf %21 : vector<8x32xf32> to vector<8x32xbf16>
    %c0_5 = arith.constant 0 : index
    %c0_6 = arith.constant 0 : index
    %23 = vector.load %arg12[%c0_5, %c0_6] : memref<8x128xf32, #tpu.memory_space<vmem>>, vector<8x128xf32>
    %c0_7 = arith.constant 0 : index
    %c0_8 = arith.constant 0 : index
    %24 = vector.load %arg5[%c0_7, %c0_8] : memref<16x128xbf16, #tpu.memory_space<vmem>>, vector<16x128xbf16>
    %cst = arith.constant dense<0.000000e+00> : vector<8x128xf32>
    %25 = tpu.matmul %13, %24, %cst {dimension_numbers = #tpu.dot_dimension_numbers<[1], [0], [0], [1], [0, 0, 1, 1], [], []>} : vector<8x16xbf16>, vector<16x128xbf16>, vector<8x128xf32> -> vector<8x128xf32>
    %c0_9 = arith.constant 0 : index
    %c0_10 = arith.constant 0 : index
    %26 = vector.load %arg6[%c0_9, %c0_10] : memref<32x128xbf16, #tpu.memory_space<vmem>>, vector<32x128xbf16>
    %cst_11 = arith.constant dense<0.000000e+00> : vector<8x128xf32>
    %27 = tpu.matmul %22, %26, %cst_11 {dimension_numbers = #tpu.dot_dimension_numbers<[1], [0], [0], [1], [0, 0, 1, 1], [], []>} : vector<8x32xbf16>, vector<32x128xbf16>, vector<8x128xf32> -> vector<8x128xf32>
    %28 = arith.addf %25, %27 : vector<8x128xf32>
    %29 = arith.addf %23, %28 : vector<8x128xf32>
    %c0_12 = arith.constant 0 : index
    %c0_13 = arith.constant 0 : index
    %30 = vector.load %arg12[%c0_12, %c0_13] : memref<8x128xf32, #tpu.memory_space<vmem>>, vector<8x128xf32>
    tpu.vector_store %arg12[%c0_12, %c0_13], %29 {strides = array<i32>} : memref<8x128xf32, #tpu.memory_space<vmem>>, vector<8x128xf32>,
    %c0_i32_14 = arith.constant 0 : i32
    %31 = arith.cmpi eq, %arg1, %c0_i32_14 : i32
    %32 = arith.extui %31 : i1 to i32
    %c0_i32_15 = arith.constant 0 : i32
    %33 = arith.cmpi ne, %32, %c0_i32_15 : i32
    scf.if %33 {
      %c0_16 = arith.constant 0 : index
      %c0_17 = arith.constant 0 : index
      %34 = vector.load %arg12[%c0_16, %c0_17] : memref<8x128xf32, #tpu.memory_space<vmem>>, vector<8x128xf32>
      %cst_18 = arith.constant 0.000000e+00 : f32
      %35 = vector.broadcast %cst_18 : f32 to vector<8x128xf32>
      %36 = arith.maximumf %34, %35 : vector<8x128xf32>
      %37 = arith.truncf %36 : vector<8x128xf32> to vector<8x128xbf16>
      %c0_19 = arith.constant 0 : index
      %c0_20 = arith.constant 0 : index
      %38 = vector.load %arg7[%c0_19, %c0_20] : memref<128x128xbf16, #tpu.memory_space<vmem>>, vector<128x128xbf16>
      %cst_21 = arith.constant dense<0.000000e+00> : vector<8x128xf32>
      %39 = tpu.matmul %37, %38, %cst_21 {dimension_numbers = #tpu.dot_dimension_numbers<[1], [0], [0], [1], [0, 0, 1, 1], [], []>} : vector<8x128xbf16>, vector<128x128xbf16>, vector<8x128xf32> -> vector<8x128xf32>
      %c0_22 = arith.constant 0 : index
      %c0_23 = arith.constant 0 : index
      %40 = vector.load %arg8[%c0_22, %c0_23] : memref<1x128xf32, #tpu.memory_space<vmem>>, vector<1x128xf32>
      %41 = vector.broadcast %40 : vector<1x128xf32> to vector<8x128xf32>
      %42 = arith.addf %39, %41 : vector<8x128xf32>
      %cst_24 = arith.constant 0.000000e+00 : f32
      %43 = vector.broadcast %cst_24 : f32 to vector<8x128xf32>
      %44 = arith.maximumf %42, %43 : vector<8x128xf32>
      %45 = arith.truncf %44 : vector<8x128xf32> to vector<8x128xbf16>
      %c0_25 = arith.constant 0 : index
      %c0_26 = arith.constant 0 : index
      %46 = vector.load %arg9[%c0_25, %c0_26] : memref<128x128xbf16, #tpu.memory_space<vmem>>, vector<128x128xbf16>
      %cst_27 = arith.constant dense<0.000000e+00> : vector<8x128xf32>
      %47 = tpu.matmul %45, %46, %cst_27 {dimension_numbers = #tpu.dot_dimension_numbers<[1], [0], [0], [1], [0, 0, 1, 1], [], []>} : vector<8x128xbf16>, vector<128x128xbf16>, vector<8x128xf32> -> vector<8x128xf32>
      %c0_28 = arith.constant 0 : index
      %c0_29 = arith.constant 0 : index
      %48 = vector.load %arg10[%c0_28, %c0_29] : memref<1x128xf32, #tpu.memory_space<vmem>>, vector<1x128xf32>
      %49 = vector.broadcast %48 : vector<1x128xf32> to vector<8x128xf32>
      %50 = arith.addf %47, %49 : vector<8x128xf32>
      %c0_30 = arith.constant 0 : index
      %c0_31 = arith.constant 0 : index
      %51 = vector.load %arg11[%c0_30, %c0_31] : memref<8x128xf32, #tpu.memory_space<vmem>>, vector<8x128xf32>
      tpu.vector_store %arg11[%c0_30, %c0_31], %50 {strides = array<i32>} : memref<8x128xf32, #tpu.memory_space<vmem>>, vector<8x128xf32>,
    } else {
    }
    return
  }
  func.func @transform_0(%arg0: i32, %arg1: i32) -> (i32, i32) {
    %c0_i32 = arith.constant 0 : i32
    %c0_i32_0 = arith.constant 0 : i32
    return %arg0, %c0_i32 : i32, i32
  }
  func.func @transform_1(%arg0: i32, %arg1: i32) -> (i32, i32) {
    %c0_i32 = arith.constant 0 : i32
    %c0_i32_0 = arith.constant 0 : i32
    return %c0_i32, %arg1 : i32, i32
  }
  func.func @transform_2(%arg0: i32, %arg1: i32) -> (i32, i32) {
    %c0_i32 = arith.constant 0 : i32
    %c0_i32_0 = arith.constant 0 : i32
    return %c0_i32, %arg1 : i32, i32
  }
  func.func @transform_3(%arg0: i32, %arg1: i32) -> (i32, i32) {
    %c0_i32 = arith.constant 0 : i32
    %c0_i32_0 = arith.constant 0 : i32
    return %arg1, %c0_i32 : i32, i32
  }
  func.func @transform_4(%arg0: i32, %arg1: i32) -> (i32, i32) {
    %c0_i32 = arith.constant 0 : i32
    %c0_i32_0 = arith.constant 0 : i32
    return %arg1, %c0_i32 : i32, i32
  }
  func.func @transform_5(%arg0: i32, %arg1: i32) -> (i32, i32) {
    %c0_i32 = arith.constant 0 : i32
    %c0_i32_0 = arith.constant 0 : i32
    %c0_i32_1 = arith.constant 0 : i32
    return %c0_i32, %c0_i32_0 : i32, i32
  }
  func.func @transform_6(%arg0: i32, %arg1: i32) -> (i32, i32) {
    %c0_i32 = arith.constant 0 : i32
    %c0_i32_0 = arith.constant 0 : i32
    %c0_i32_1 = arith.constant 0 : i32
    return %c0_i32, %c0_i32_0 : i32, i32
  }
  func.func @transform_7(%arg0: i32, %arg1: i32) -> (i32, i32) {
    %c0_i32 = arith.constant 0 : i32
    %c0_i32_0 = arith.constant 0 : i32
    %c0_i32_1 = arith.constant 0 : i32
    return %c0_i32, %c0_i32_0 : i32, i32
  }
  func.func @transform_8(%arg0: i32, %arg1: i32) -> (i32, i32) {
    %c0_i32 = arith.constant 0 : i32
    %c0_i32_0 = arith.constant 0 : i32
    %c0_i32_1 = arith.constant 0 : i32
    return %c0_i32, %c0_i32_0 : i32, i32
  }
  func.func @transform_9(%arg0: i32, %arg1: i32) -> (i32, i32) {
    %c0_i32 = arith.constant 0 : i32
    %c0_i32_0 = arith.constant 0 : i32
    return %arg0, %c0_i32 : i32, i32
  }
}

</mosaic_0001>

<llo_original>
// kernel: tpu_custom_call.1
$region0: #{tpu_custom_call.1}
  #allocation0 [shape = 'u32[]', space=smem, size = 0x4, offset = 0x4, fixed_abs, tag = 'smem constant byte address 0x4 - core index']
  #allocation1 [shape = 'u32[144,128]{1,0:T(1,128)}', space=vmem, size = 0x12000, scoped, tag = 'internal scratch']
  #allocation2 [shape = 'f32[8,128]{1,0:T(8,128)}', space=vmem, size = 0x1000, scoped, tag = 'scratch operand']
  %s0 = inlined_call_operand.hbm [shape: f32[8,128], index: 0, kind: input, shape index: {}]
  %s1 = inlined_call_operand.vmem [shape: s32[1,16], index: 1, kind: input, shape index: {}]
  %s2 = inlined_call_operand.vmem [shape: s32[1,32], index: 2, kind: input, shape index: {}]
  %s3 = inlined_call_operand.hbm [shape: bf16[16,128], index: 3, kind: input, shape index: {}]
  %s4 = inlined_call_operand.hbm [shape: bf16[32,128], index: 4, kind: input, shape index: {}]
  %s5 = inlined_call_operand.hbm [shape: bf16[128,128], index: 5, kind: input, shape index: {}]
  %s6 = inlined_call_operand.vmem [shape: f32[1,128], index: 6, kind: input, shape index: {}]
  %s7 = inlined_call_operand.hbm [shape: bf16[128,128], index: 7, kind: input, shape index: {}]
  %s8 = inlined_call_operand.vmem [shape: f32[1,128], index: 8, kind: input, shape index: {}]
  %s9 = inlined_call_operand.hbm [shape: f32[8,128], index: 9, kind: output, shape index: {}]
  %s10 = sld [smem:[#allocation0]]
  $region74: #{tpu_custom_call.1} parent=0
    _
  %s12 = ssub.s32 1, %s10
  %s13 = scalar_select 0, %s12, %s10
  $region1: #{tpu_custom_call.1} parent=0
    #allocation3 [shape = 'u8[4096]{0}', space=vmem, size = 0x1000, scoped, tag = 'input window, operand 0, single buffered']
    #allocation4 [shape = 's32[1]{0}', space=sflag, size = 0x4, scoped, tag = 'scoped memory for tpu_custom_call.1']
    #allocation5 [shape = 's32[1]{0}', space=sflag, size = 0x4, scoped, tag = 'scoped memory for tpu_custom_call.1']
    #allocation6 [shape = 'u8[4096]{0}', space=vmem, size = 0x1000, scoped, tag = 'input window, operand 3, single buffered']
    #allocation7 [shape = 's32[1]{0}', space=sflag, size = 0x4, scoped, tag = 'scoped memory for tpu_custom_call.1']
    #allocation8 [shape = 'u8[8192]{0}', space=vmem, size = 0x2000, scoped, tag = 'input window, operand 4, single buffered']
    #allocation9 [shape = 'u8[32768]{0}', space=vmem, size = 0x8000, scoped, tag = 'input window, operand 5, single buffered']
    #allocation10 [shape = 's32[1]{0}', space=sflag, size = 0x4, scoped, tag = 'scoped memory for tpu_custom_call.1']
    #allocation11 [shape = 'u8[32768]{0}', space=vmem, size = 0x8000, scoped, tag = 'input window, operand 7, single buffered']
    #allocation12 [shape = 'u8[4096]{0}', space=vmem, size = 0x1000, scoped, tag = 'output window, operand 0, single buffered']
    %14 = vsyncpa [#allocation4], 0
    %15 = vsyncpa [#allocation7], 0
    %16 = vsyncpa [#allocation10], 0
    %17 = vsyncpa [#allocation5], 0
    // Predicated region
    $region2: #{tpu_custom_call.1} parent=1 // pred_check
      _
    $region3: #{tpu_custom_call.1} parent=1 // pred_check_branch
      %19 = sbr.rel (0) target = $region5
    $region4: #{tpu_custom_call.1} parent=1 // pred_region
      %s21 = ssub.s32 128, 128
      %22 = vsyncadd [#allocation4], %s21
      %s24 = sshll.u32 [#allocation3], 4
      %s25 = int_to_ptr.vmem [resolvable:$true] %s24
      %27 = dma.hbm_to_vmem [thread:$0]  %s0, 128, %s25, [#allocation4]
    $region5: #{tpu_custom_call.1} parent=1 // pred_fallthru
      _
    // Predicated region
    $region6: #{tpu_custom_call.1} parent=1 // pred_check
      _
    $region7: #{tpu_custom_call.1} parent=1 // pred_check_branch
      %29 = sbr.rel (0) target = $region9
    $region8: #{tpu_custom_call.1} parent=1 // pred_region
      _
    $region9: #{tpu_custom_call.1} parent=1 // pred_fallthru
      _
    // Predicated region
    $region10: #{tpu_custom_call.1} parent=1 // pred_check
      _
    $region11: #{tpu_custom_call.1} parent=1 // pred_check_branch
      %31 = sbr.rel (0) target = $region13
    $region12: #{tpu_custom_call.1} parent=1 // pred_region
      _
    $region13: #{tpu_custom_call.1} parent=1 // pred_fallthru
      _
    // Predicated region
    $region14: #{tpu_custom_call.1} parent=1 // pred_check
      _
    $region15: #{tpu_custom_call.1} parent=1 // pred_check_branch
      %33 = sbr.rel (0) target = $region17
    $region16: #{tpu_custom_call.1} parent=1 // pred_region
      %s35 = ssub.s32 128, 128
      %36 = vsyncadd [#allocation7], %s35
      %s37 = sshll.u32 [#allocation6], 4
      %s38 = int_to_ptr.vmem [resolvable:$true] %s37
      %43 = dma.hbm_to_vmem [thread:$0]  %s3, 128, %s38, [#allocation7], 64, 64, 4
    $region17: #{tpu_custom_call.1} parent=1 // pred_fallthru
      _
    // Predicated region
    $region18: #{tpu_custom_call.1} parent=1 // pred_check
      _
    $region19: #{tpu_custom_call.1} parent=1 // pred_check_branch
      %45 = sbr.rel (0) target = $region21
    $region20: #{tpu_custom_call.1} parent=1 // pred_region
      %s47 = ssub.s32 256, 256
      %48 = vsyncadd [#allocation7], %s47
      %s49 = sshll.u32 [#allocation8], 4
      %s50 = int_to_ptr.vmem [resolvable:$true] %s49
      %55 = dma.hbm_to_vmem [thread:$0]  %s4, 256, %s50, [#allocation7], 64, 64, 4
    $region21: #{tpu_custom_call.1} parent=1 // pred_fallthru
      _
    // Predicated region
    $region22: #{tpu_custom_call.1} parent=1 // pred_check
      _
    $region23: #{tpu_custom_call.1} parent=1 // pred_check_branch
      %57 = sbr.rel (0) target = $region25
    $region24: #{tpu_custom_call.1} parent=1 // pred_region
      %s59 = ssub.s32 1024, 1024
      %60 = vsyncadd [#allocation10], %s59
      %s61 = sshll.u32 [#allocation9], 4
      %s62 = int_to_ptr.vmem [resolvable:$true] %s61
      %67 = dma.hbm_to_vmem [thread:$0]  %s5, 1024, %s62, [#allocation10], 64, 64, 4
    $region25: #{tpu_custom_call.1} parent=1 // pred_fallthru
      _
    // Predicated region
    $region26: #{tpu_custom_call.1} parent=1 // pred_check
      _
    $region27: #{tpu_custom_call.1} parent=1 // pred_check_branch
      %69 = sbr.rel (0) target = $region29
    $region28: #{tpu_custom_call.1} parent=1 // pred_region
      _
    $region29: #{tpu_custom_call.1} parent=1 // pred_fallthru
      _
    // Predicated region
    $region30: #{tpu_custom_call.1} parent=1 // pred_check
      _
    $region31: #{tpu_custom_call.1} parent=1 // pred_check_branch
      %71 = sbr.rel (0) target = $region33
    $region32: #{tpu_custom_call.1} parent=1 // pred_region
      %s73 = ssub.s32 1024, 1024
      %74 = vsyncadd [#allocation10], %s73
      %s75 = sshll.u32 [#allocation11], 4
      %s76 = int_to_ptr.vmem [resolvable:$true] %s75
      %81 = dma.hbm_to_vmem [thread:$0]  %s7, 1024, %s76, [#allocation10], 64, 64, 4
    $region33: #{tpu_custom_call.1} parent=1 // pred_fallthru
      _
    // Predicated region
    $region34: #{tpu_custom_call.1} parent=1 // pred_check
      _
    $region35: #{tpu_custom_call.1} parent=1 // pred_check_branch
      %83 = sbr.rel (0) target = $region37
    $region36: #{tpu_custom_call.1} parent=1 // pred_region
      _
    $region37: #{tpu_custom_call.1} parent=1 // pred_fallthru
      _
    // Predicated region
    $region38: #{tpu_custom_call.1} parent=1 // pred_check
      _
    $region39: #{tpu_custom_call.1} parent=1 // pred_check_branch
      %85 = sbr.rel (0) target = $region41
    $region40: #{tpu_custom_call.1} parent=1 // pred_region
      %86 = dma.done [#allocation4], 128
    $region41: #{tpu_custom_call.1} parent=1 // pred_fallthru
      _
    // Predicated region
    $region42: #{tpu_custom_call.1} parent=1 // pred_check
      _
    $region43: #{tpu_custom_call.1} parent=1 // pred_check_branch
      %88 = sbr.rel (0) target = $region45
    $region44: #{tpu_custom_call.1} parent=1 // pred_region
      %89 = dma.done [#allocation7], 128
    $region45: #{tpu_custom_call.1} parent=1 // pred_fallthru
      _
    // Predicated region
    $region46: #{tpu_custom_call.1} parent=1 // pred_check
      _
    $region47: #{tpu_custom_call.1} parent=1 // pred_check_branch
      %91 = sbr.rel (0) target = $region49
    $region48: #{tpu_custom_call.1} parent=1 // pred_region
      %92 = dma.done [#allocation7], 256
    $region49: #{tpu_custom_call.1} parent=1 // pred_fallthru
      _
    // Predicated region
    $region50: #{tpu_custom_call.1} parent=1 // pred_check
      _
    $region51: #{tpu_custom_call.1} parent=1 // pred_check_branch
      %94 = sbr.rel (0) target = $region53
    $region52: #{tpu_custom_call.1} parent=1 // pred_region
      %95 = dma.done [#allocation10], 1024
    $region53: #{tpu_custom_call.1} parent=1 // pred_fallthru
      _
    // Predicated region
    $region54: #{tpu_custom_call.1} parent=1 // pred_check
      _
    $region55: #{tpu_custom_call.1} parent=1 // pred_check_branch
      %97 = sbr.rel (0) target = $region57
    $region56: #{tpu_custom_call.1} parent=1 // pred_region
      %98 = dma.done [#allocation10], 1024
    $region57: #{tpu_custom_call.1} parent=1 // pred_fallthru
      _
    %p100 = scmp.eq.s32.totalorder 0, 0
    // Predicated region
    $region58: #{tpu_custom_call.1} parent=1 // pred_check
      %p101 = pneg %p100
    $region59: #{tpu_custom_call.1} parent=1 // pred_check_branch
      %103 = sbr.rel (%p101) target = $region61
    $region60: #{tpu_custom_call.1} parent=1 // pred_region
      %v104 = vld [vmem:[#allocation3] sm:$0xff]
      %105 = vst [vmem:[#allocation2] sm:$0xff] %v104
    $region61: #{tpu_custom_call.1} parent=1 // pred_fallthru
      _
    %v106 = vlaneseq
    %v107 = vshrl.u32 %v106, 7
    %v108 = vld [vmem:[%s1] sm:$0x1]
    %s109 = smul.u32 0, 8
    %v110 = vstv %s109
    %v111 = vsub.s32 %v108, %v110
    %v112 = vlaneseq
    %v113 = vshrl.u32 %v112, 7
    %v114 = vsub.s32 0, %v113
    %v115 = vrot.slane %v111, %v114
    %vm116 = vcmp.eq.s32.totalorder %v107, %v115
    %v117 = vsel %vm116, 1, 0
    %v118 = vcvt.s32.f32 %v117
    %v119 = vpack.c.bf16 %v118, %v118
    %v120 = vld [vmem:[%s2] sm:$0x1]
    %v121 = vsub.s32 %v120, %v110
    %v122 = vlaneseq
    %v123 = vshrl.u32 %v122, 7
    %v124 = vsub.s32 0, %v123
    %v125 = vrot.slane %v121, %v124
    %vm126 = vcmp.eq.s32.totalorder %v107, %v125
    %v127 = vsel %vm126, 1, 0
    %v128 = vcvt.s32.f32 %v127
    %v129 = vpack.c.bf16 %v128, %v128
    %v130 = vld [vmem:[#allocation2] sm:$0xff]
    %v131 = vld [vmem:[#allocation6] sm:$0xf]
    %v132 = vld [vmem:[#allocation6 + $0x4] sm:$0xf]
    %v133 = vld [vmem:[#allocation8] sm:$0xf]
    %v134 = vld [vmem:[#allocation8 + $0x4] sm:$0xf]
    %v135 = vld [vmem:[#allocation8 + $0x8] sm:$0xf]
    %v136 = vld [vmem:[#allocation8 + $0xc] sm:$0xf]
    %v141 = vunpack.c.l.b16 %v133
    %v142 = vunpack.c.l.b16 %v134
    %v143 = vunpack.c.l.b16 %v135
    %v144 = vunpack.c.l.b16 %v136
    %v145 = vpack.c.b16 %v142, %v141
    %v146 = vpack.c.b16 %v144, %v143
    %vm149 = vcmask 261120
    %v151 = vsel %vm149, %v129, 0
    %153 = vmatprep.subr.bf16.mxu0 0
    %154 = vmatpush1.bf16.msra.mxu0 0
    %155 = vmatprep.subr.bf16.mxu0 0
    %156 = vmatpush1.bf16.msra.mxu0 0
    %157 = vmatprep.subr.bf16.mxu0 0
    %158 = vmatpush1.bf16.msra.mxu0 0
    %159 = vmatprep.subr.bf16.mxu0 0
    %160 = vmatpush1.bf16.msra.mxu0 0
    %161 = vmatprep.subr.bf16.mxu0 0
    %162 = vmatpush1.bf16.msra.mxu0 0
    %163 = vmatprep.subr.bf16.mxu0 0
    %164 = vmatpush1.bf16.msra.mxu0 0
    %165 = vmatprep.subr.bf16.mxu0 0
    %166 = vmatpush1.bf16.msra.mxu0 %v146
    %167 = vmatprep.subr.bf16.mxu0 0
    %168 = vmatpush1.bf16.msra.mxu0 %v145
    %169 = vmatprep.subr.bf16.mxu0 0
    %170 = vmatpush2.bf16.msra.mxu0 0
    %171 = vmatprep.subr.bf16.mxu0 0
    %172 = vmatpush2.bf16.msra.mxu0 0
    %173 = vmatprep.subr.bf16.mxu0 0
    %174 = vmatpush2.bf16.msra.mxu0 0
    %175 = vmatprep.subr.bf16.mxu0 0
    %176 = vmatpush2.bf16.msra.mxu0 0
    %177 = vmatprep.subr.bf16.mxu0 0
    %178 = vmatpush2.bf16.msra.mxu0 0
    %179 = vmatprep.subr.bf16.mxu0 0
    %180 = vmatpush2.bf16.msra.mxu0 0
    %181 = vmatprep.subr.bf16.mxu0 0
    %182 = vmatpush2.bf16.msra.mxu0 0
    %183 = vmatprep.subr.bf16.mxu0 0
    %184 = vmatpush2.bf16.msra.mxu0 0
    %185 = vmatprep.mubr.bf16.mxu0 0
    %186 = vmatmul.mubr.bf16.gmra.mxu0 %v151
    %v187 = vpop.f32.mrf.mxu0
    %v188 = vadd.f32 0.0, %v187
    %v189 = vpop.f32.mrf.mxu0
    %v190 = vpop.f32.mrf.mxu0
    %v191 = vpop.f32.mrf.mxu0
    %192 = vdwg.mxu0
    %v195 = vunpack.c.l.b16 %v131
    %v196 = vunpack.c.l.b16 %v132
    %v197 = vpack.c.b16 %v196, %v195
    %vm199 = vcmask 130048
    %v201 = vsel %vm199, %v119, 0
    %203 = vmatprep.subr.bf16.mxu0 0
    %204 = vmatpush1.bf16.msra.mxu0 0
    %205 = vmatprep.subr.bf16.mxu0 0
    %206 = vmatpush1.bf16.msra.mxu0 0
    %207 = vmatprep.subr.bf16.mxu0 0
    %208 = vmatpush1.bf16.msra.mxu0 0
    %209 = vmatprep.subr.bf16.mxu0 0
    %210 = vmatpush1.bf16.msra.mxu0 0
    %211 = vmatprep.subr.bf16.mxu0 0
    %212 = vmatpush1.bf16.msra.mxu0 0
    %213 = vmatprep.subr.bf16.mxu0 0
    %214 = vmatpush1.bf16.msra.mxu0 0
    %215 = vmatprep.subr.bf16.mxu0 0
    %216 = vmatpush1.bf16.msra.mxu0 0
    %217 = vmatprep.subr.bf16.mxu0 0
    %218 = vmatpush1.bf16.msra.mxu0 %v197
    %219 = vmatprep.subr.bf16.mxu0 0
    %220 = vmatpush2.bf16.msra.mxu0 0
    %221 = vmatprep.subr.bf16.mxu0 0
    %222 = vmatpush2.bf16.msra.mxu0 0
    %223 = vmatprep.subr.bf16.mxu0 0
    %224 = vmatpush2.bf16.msra.mxu0 0
    %225 = vmatprep.subr.bf16.mxu0 0
    %226 = vmatpush2.bf16.msra.mxu0 0
    %227 = vmatprep.subr.bf16.mxu0 0
    %228 = vmatpush2.bf16.msra.mxu0 0
    %229 = vmatprep.subr.bf16.mxu0 0
    %230 = vmatpush2.bf16.msra.mxu0 0
    %231 = vmatprep.subr.bf16.mxu0 0
    %232 = vmatpush2.bf16.msra.mxu0 0
    %233 = vmatprep.subr.bf16.mxu0 0
    %234 = vmatpush2.bf16.msra.mxu0 0
    %235 = vmatprep.mubr.bf16.mxu0 0
    %236 = vmatmul.mubr.bf16.gmra.mxu0 %v201
    %v237 = vpop.f32.mrf.mxu0
    %v238 = vadd.f32 %v188, %v237
    %v239 = vpop.f32.mrf.mxu0
    %v240 = vpop.f32.mrf.mxu0
    %v241 = vpop.f32.mrf.mxu0
    %242 = vdwg.mxu0
    %v243 = vadd.f32 %v130, %v238
    %244 = vst [vmem:[#allocation2] sm:$0xff] %v243
    // Predicated region
    $region62: #{tpu_custom_call.1} parent=1 // pred_check
      %p245 = pneg %p100
    $region63: #{tpu_custom_call.1} parent=1 // pred_check_branch
      %247 = sbr.rel (%p245) target = $region65
    $region64: #{tpu_custom_call.1} parent=1 // pred_region
      %v248 = vld [vmem:[#allocation2] sm:$0xff]
      %v249 = vmax.f32 %v248, 0.0
      %v250 = vpack.c.bf16 %v249, %v249
      %v251 = vld [vmem:[#allocation9] sm:$0xf]
      %v252 = vld [vmem:[#allocation9 + $0x4] sm:$0xf]
      %v253 = vld [vmem:[#allocation9 + $0x8] sm:$0xf]
      %v254 = vld [vmem:[#allocation9 + $0xc] sm:$0xf]
      %v255 = vld [vmem:[#allocation9 + $0x10] sm:$0xf]
      %v256 = vld [vmem:[#allocation9 + $0x14] sm:$0xf]
      %v257 = vld [vmem:[#allocation9 + $0x18] sm:$0xf]
      %v258 = vld [vmem:[#allocation9 + $0x1c] sm:$0xf]
      %v259 = vld [vmem:[#allocation9 + $0x20] sm:$0xf]
      %v260 = vld [vmem:[#allocation9 + $0x24] sm:$0xf]
      %v261 = vld [vmem:[#allocation9 + $0x28] sm:$0xf]
      %v262 = vld [vmem:[#allocation9 + $0x2c] sm:$0xf]
      %v263 = vld [vmem:[#allocation9 + $0x30] sm:$0xf]
      %v264 = vld [vmem:[#allocation9 + $0x34] sm:$0xf]
      %v265 = vld [vmem:[#allocation9 + $0x38] sm:$0xf]
      %v266 = vld [vmem:[#allocation9 + $0x3c] sm:$0xf]
      %v267 = vld [vmem:[%s6] sm:$0x1]
      %v269 = vlaneseq
      %v270 = vshrl.u32 %v269, 7
      %v271 = vsub.s32 0, %v270
      %v272 = vrot.slane %v267, %v271
      %v290 = vunpack.c.l.b16 %v251
      %v291 = vunpack.c.l.b16 %v252
      %v292 = vunpack.c.l.b16 %v253
      %v293 = vunpack.c.l.b16 %v254
      %v294 = vunpack.c.l.b16 %v255
      %v295 = vunpack.c.l.b16 %v256
      %v296 = vunpack.c.l.b16 %v257
      %v297 = vunpack.c.l.b16 %v258
      %v298 = vunpack.c.l.b16 %v259
      %v299 = vunpack.c.l.b16 %v260
      %v300 = vunpack.c.l.b16 %v261
      %v301 = vunpack.c.l.b16 %v262
      %v302 = vunpack.c.l.b16 %v263
      %v303 = vunpack.c.l.b16 %v264
      %v304 = vunpack.c.l.b16 %v265
      %v305 = vunpack.c.l.b16 %v266
      %v306 = vpack.c.b16 %v291, %v290
      %v307 = vpack.c.b16 %v293, %v292
      %v308 = vpack.c.b16 %v295, %v294
      %v309 = vpack.c.b16 %v297, %v296
      %v310 = vpack.c.b16 %v299, %v298
      %v311 = vpack.c.b16 %v301, %v300
      %v312 = vpack.c.b16 %v303, %v302
      %v313 = vpack.c.b16 %v305, %v304
      %322 = vmatprep.subr.bf16.mxu0 0
      %323 = vmatpush1.bf16.msra.mxu0 %v313
      %324 = vmatprep.subr.bf16.mxu0 0
      %325 = vmatpush1.bf16.msra.mxu0 %v312
      %326 = vmatprep.subr.bf16.mxu0 0
      %327 = vmatpush1.bf16.msra.mxu0 %v311
      %328 = vmatprep.subr.bf16.mxu0 0
      %329 = vmatpush1.bf16.msra.mxu0 %v310
      %330 = vmatprep.subr.bf16.mxu0 0
      %331 = vmatpush1.bf16.msra.mxu0 %v309
      %332 = vmatprep.subr.bf16.mxu0 0
      %333 = vmatpush1.bf16.msra.mxu0 %v308
      %334 = vmatprep.subr.bf16.mxu0 0
      %335 = vmatpush1.bf16.msra.mxu0 %v307
      %336 = vmatprep.subr.bf16.mxu0 0
      %337 = vmatpush1.bf16.msra.mxu0 %v306
      %338 = vmatprep.subr.bf16.mxu0 0
      %339 = vmatpush2.bf16.msra.mxu0 0
      %340 = vmatprep.subr.bf16.mxu0 0
      %341 = vmatpush2.bf16.msra.mxu0 0
      %342 = vmatprep.subr.bf16.mxu0 0
      %343 = vmatpush2.bf16.msra.mxu0 0
      %344 = vmatprep.subr.bf16.mxu0 0
      %345 = vmatpush2.bf16.msra.mxu0 0
      %346 = vmatprep.subr.bf16.mxu0 0
      %347 = vmatpush2.bf16.msra.mxu0 0
      %348 = vmatprep.subr.bf16.mxu0 0
      %349 = vmatpush2.bf16.msra.mxu0 0
      %350 = vmatprep.subr.bf16.mxu0 0
      %351 = vmatpush2.bf16.msra.mxu0 0
      %352 = vmatprep.subr.bf16.mxu0 0
      %353 = vmatpush2.bf16.msra.mxu0 0
      %354 = vmatprep.mubr.bf16.mxu0 0
      %355 = vmatmul.mubr.bf16.gmra.mxu0 %v250
      %v356 = vpop.f32.mrf.mxu0
      %v357 = vadd.f32 %v272, %v356
      %v358 = vpop.f32.mrf.mxu0
      %v359 = vpop.f32.mrf.mxu0
      %v360 = vpop.f32.mrf.mxu0
      %361 = vdwg.mxu0
      %v362 = vmax.f32 %v357, 0.0
      %v363 = vpack.c.bf16 %v362, %v362
      %v364 = vld [vmem:[#allocation11] sm:$0xf]
      %v365 = vld [vmem:[#allocation11 + $0x4] sm:$0xf]
      %v366 = vld [vmem:[#allocation11 + $0x8] sm:$0xf]
      %v367 = vld [vmem:[#allocation11 + $0xc] sm:$0xf]
      %v368 = vld [vmem:[#allocation11 + $0x10] sm:$0xf]
      %v369 = vld [vmem:[#allocation11 + $0x14] sm:$0xf]
      %v370 = vld [vmem:[#allocation11 + $0x18] sm:$0xf]
      %v371 = vld [vmem:[#allocation11 + $0x1c] sm:$0xf]
      %v372 = vld [vmem:[#allocation11 + $0x20] sm:$0xf]
      %v373 = vld [vmem:[#allocation11 + $0x24] sm:$0xf]
      %v374 = vld [vmem:[#allocation11 + $0x28] sm:$0xf]
      %v375 = vld [vmem:[#allocation11 + $0x2c] sm:$0xf]
      %v376 = vld [vmem:[#allocation11 + $0x30] sm:$0xf]
      %v377 = vld [vmem:[#allocation11 + $0x34] sm:$0xf]
      %v378 = vld [vmem:[#allocation11 + $0x38] sm:$0xf]
      %v379 = vld [vmem:[#allocation11 + $0x3c] sm:$0xf]
      %v380 = vld [vmem:[%s8] sm:$0x1]
      %v382 = vlaneseq
      %v383 = vshrl.u32 %v382, 7
      %v384 = vsub.s32 0, %v383
      %v385 = vrot.slane %v380, %v384
      %v403 = vunpack.c.l.b16 %v364
      %v404 = vunpack.c.l.b16 %v365
      %v405 = vunpack.c.l.b16 %v366
      %v406 = vunpack.c.l.b16 %v367
      %v407 = vunpack.c.l.b16 %v368
      %v408 = vunpack.c.l.b16 %v369
      %v409 = vunpack.c.l.b16 %v370
      %v410 = vunpack.c.l.b16 %v371
      %v411 = vunpack.c.l.b16 %v372
      %v412 = vunpack.c.l.b16 %v373
      %v413 = vunpack.c.l.b16 %v374
      %v414 = vunpack.c.l.b16 %v375
      %v415 = vunpack.c.l.b16 %v376
      %v416 = vunpack.c.l.b16 %v377
      %v417 = vunpack.c.l.b16 %v378
      %v418 = vunpack.c.l.b16 %v379
      %v419 = vpack.c.b16 %v404, %v403
      %v420 = vpack.c.b16 %v406, %v405
      %v421 = vpack.c.b16 %v408, %v407
      %v422 = vpack.c.b16 %v410, %v409
      %v423 = vpack.c.b16 %v412, %v411
      %v424 = vpack.c.b16 %v414, %v413
      %v425 = vpack.c.b16 %v416, %v415
      %v426 = vpack.c.b16 %v418, %v417
      %435 = vmatprep.subr.bf16.mxu0 0
      %436 = vmatpush1.bf16.msra.mxu0 %v426
      %437 = vmatprep.subr.bf16.mxu0 0
      %438 = vmatpush1.bf16.msra.mxu0 %v425
      %439 = vmatprep.subr.bf16.mxu0 0
      %440 = vmatpush1.bf16.msra.mxu0 %v424
      %441 = vmatprep.subr.bf16.mxu0 0
      %442 = vmatpush1.bf16.msra.mxu0 %v423
      %443 = vmatprep.subr.bf16.mxu0 0
      %444 = vmatpush1.bf16.msra.mxu0 %v422
      %445 = vmatprep.subr.bf16.mxu0 0
      %446 = vmatpush1.bf16.msra.mxu0 %v421
      %447 = vmatprep.subr.bf16.mxu0 0
      %448 = vmatpush1.bf16.msra.mxu0 %v420
      %449 = vmatprep.subr.bf16.mxu0 0
      %450 = vmatpush1.bf16.msra.mxu0 %v419
      %451 = vmatprep.subr.bf16.mxu0 0
      %452 = vmatpush2.bf16.msra.mxu0 0
      %453 = vmatprep.subr.bf16.mxu0 0
      %454 = vmatpush2.bf16.msra.mxu0 0
      %455 = vmatprep.subr.bf16.mxu0 0
      %456 = vmatpush2.bf16.msra.mxu0 0
      %457 = vmatprep.subr.bf16.mxu0 0
      %458 = vmatpush2.bf16.msra.mxu0 0
      %459 = vmatprep.subr.bf16.mxu0 0
      %460 = vmatpush2.bf16.msra.mxu0 0
      %461 = vmatprep.subr.bf16.mxu0 0
      %462 = vmatpush2.bf16.msra.mxu0 0
      %463 = vmatprep.subr.bf16.mxu0 0
      %464 = vmatpush2.bf16.msra.mxu0 0
      %465 = vmatprep.subr.bf16.mxu0 0
      %466 = vmatpush2.bf16.msra.mxu0 0
      %467 = vmatprep.mubr.bf16.mxu0 0
      %468 = vmatmul.mubr.bf16.gmra.mxu0 %v363
      %v469 = vpop.f32.mrf.mxu0
      %v470 = vadd.f32 %v385, %v469
      %v471 = vpop.f32.mrf.mxu0
      %v472 = vpop.f32.mrf.mxu0
      %v473 = vpop.f32.mrf.mxu0
      %474 = vdwg.mxu0
      %475 = vst [vmem:[#allocation12] sm:$0xff] %v470
    $region65: #{tpu_custom_call.1} parent=1 // pred_fallthru
      _
    // Predicated region
    $region66: #{tpu_custom_call.1} parent=1 // pred_check
      _
    $region67: #{tpu_custom_call.1} parent=1 // pred_check_branch
      %477 = sbr.rel (0) target = $region69
    $region68: #{tpu_custom_call.1} parent=1 // pred_region
      %s479 = ssub.s32 128, 128
      %480 = vsyncadd [#allocation5], %s479
      %s482 = sshll.u32 [#allocation12], 4
      %s483 = int_to_ptr.vmem [resolvable:$true] %s482
      %485 = dma.vmem_to_hbm [thread:$0]  %s483, 128, %s9, [#allocation5]
    $region69: #{tpu_custom_call.1} parent=1 // pred_fallthru
      _
    // Predicated region
    $region70: #{tpu_custom_call.1} parent=1 // pred_check
      _
    $region71: #{tpu_custom_call.1} parent=1 // pred_check_branch
      %487 = sbr.rel (0) target = $region73
    $region72: #{tpu_custom_call.1} parent=1 // pred_region
      %488 = dma.done [#allocation5], 128
    $region73: #{tpu_custom_call.1} parent=1 // pred_fallthru
      _
    %489 = vsyncpa [#allocation4], 1
    %490 = vsyncpa [#allocation7], 1
    %491 = vsyncpa [#allocation10], 1
    %492 = vsyncpa [#allocation5], 1

</llo_original>
